<compile_context>
chip_gen: v7x
topology: tpu7x:2x2x1
jax: 0.10.0
libtpu: 0.0.40
codegen_flags: <defaults>
</compile_context>

<pallas_src>
import functools

import jax
import jax.numpy as jnp
from jax.experimental import pallas as pl
from jax.experimental.pallas import tpu as pltpu


def _auto_num_blocks(n):
    """One grid step per TensorCore: v7x has 2 TCs/chip, v5e/v6e have 1.

    Perf-only heuristic (any value is correct); on single-TC chips a single big
    block avoids the ~0.35us/step fixed grid overhead, on v7x two parallel
    steps keep both cores busy.
    """
    try:
        kind = jax.devices()[0].device_kind.lower()
    except Exception:   # defensive: never let a perf heuristic break the kernel
        kind = ""
    cores = 2 if ("v7" in kind or "7x" in kind) else 1
    g = max(1, min(n, cores))
    while n % g:        # must divide the batch evenly
        g -= 1
    return g


def conv_bn_act(x_nchw, weight, gamma, beta, running_mean, running_var,
                *, stride=1, padding=1, eps=1e-5, num_blocks=None,
                compute_dtype=jnp.float32):
    """Fused conv2d (stride 1, symmetric padding) + folded inference BN + ReLU."""
    assert stride == 1, "only the default ConvBnAct stride=1 path is implemented"
    N, Cin, H, W = x_nchw.shape
    Cout, Cin_w, KH, KW = weight.shape
    assert Cin_w == Cin  # TODO(synk): grouped / depthwise conv paths not implemented

    Hp, Wp = H + 2 * padding, W + 2 * padding
    Ho, Wo = Hp - KH + 1, Wp - KW + 1
    KK = KH * KW

    Cin_p = ((Cin + 7) // 8) * 8                 # sublane-aligned contraction width
    P = Ho * Wp                                  # flat output columns actually used
    PP = ((P + 127) // 128) * 128                # lane-dense output width (unmasked vst)
    max_off = (KH - 1) * Wp + (KW - 1)           # largest flat tap offset
    Hp2 = max(Hp, -(-(max_off + PP) // Wp))      # extra zero rows so every staged
    L = Hp2 * Wp                                 #   PP-wide tap slice stays in bounds
    # Staged tap slice k reads flat columns [off_k, off_k + PP); valid outputs
    # (columns < P) only ever consume columns of the true padded image.
    assert L >= max_off + PP and PP >= P, (L, max_off, PP, P)

    if num_blocks is None:
        num_blocks = _auto_num_blocks(N)
    G = num_blocks
    assert N % G == 0, (N, G)
    NB = N // G                                  # images per grid step

    # ---- activation: ONE fused pad (channels + spatial + flat tail rows), then a
    #      contiguous reshape (no extra HBM pass, no transpose) -----------------
    x = x_nchw.astype(compute_dtype)
    x = jnp.pad(x, ((0, 0), (0, Cin_p - Cin),
                    (padding, padding + (Hp2 - Hp)), (padding, padding)))
    x = x.reshape(N, Cin_p, L)                   # (N, Cin_p, Hp2*Wp), collapse is free

    # ---- fold inference BatchNorm: scale into the conv weights, shift stays ----
    inv_std = jax.lax.rsqrt(running_var.astype(jnp.float32) + eps)
    scale = gamma.astype(jnp.float32) * inv_std                      # (Cout,)
    shift = (beta.astype(jnp.float32)
             - running_mean.astype(jnp.float32) * scale).reshape(Cout, 1)
    w = weight.astype(jnp.float32) * scale[:, None, None, None]      # (Cout,Cin,KH,KW)
    w = jnp.pad(w, ((0, 0), (0, Cin_p - Cin), (0, 0), (0, 0)))
    # (Cout, KH, KW, Cin_p) -> (Cout, KK*Cin_p); column block k holds tap k's channels,
    # matching the staged-scratch row layout below.
    w_flat = jnp.transpose(w, (0, 2, 3, 1)).reshape(Cout, KK * Cin_p).astype(compute_dtype)

    def kernel(x_ref, w_ref, shift_ref, o_ref, stage_ref):
        # Stage all KH*KW lane-shifted tap views (each realized exactly once) into the
        # (KK*Cin_p, NB*PP) scratch so the whole block is ONE MXU dot instead of KK
        # serialized tiny weight pushes + VPU accumulates.
        for n in range(NB):                                         # static unroll
            xn = x_ref[n]                                           # (Cin_p, L)
            for k in range(KK):
                off = (k // KW) * Wp + (k % KW)                     # static flat tap offset
                stage_ref[k * Cin_p:(k + 1) * Cin_p,
                          n * PP:(n + 1) * PP] = xn[:, off:off + PP]
        # Single (Cout, KK*Cin_p) @ (KK*Cin_p, NB*PP) matmul with f32 accumulation.
        # Default MXU f32 precision matches the f32 reference to <1e-4 at these K
        # (documented tolerance); the bf16 compute_dtype fast path needs ~1e-3 rel.
        acc = jnp.dot(w_ref[...], stage_ref[...],
                      preferred_element_type=jnp.float32)           # (Cout, NB*PP)
        y = jnp.maximum(acc + shift_ref[...], 0.0)                  # BN shift + ReLU
        for n in range(NB):                                         # lane-dense stores
            o_ref[n] = y[:, n * PP:(n + 1) * PP].astype(o_ref.dtype)

    out_flat = pl.pallas_call(
        kernel,
        out_shape=jax.ShapeDtypeStruct((N, Cout, PP), x_nchw.dtype),
        grid=(G,),
        in_specs=[
            pl.BlockSpec((NB, Cin_p, L), lambda g: (g, 0, 0)),
            pl.BlockSpec((Cout, KK * Cin_p), lambda g: (0, 0)),
            pl.BlockSpec((Cout, 1), lambda g: (0, 0)),
        ],
        out_specs=pl.BlockSpec((NB, Cout, PP), lambda g: (g, 0, 0)),
        scratch_shapes=[pltpu.VMEM((KK * Cin_p, NB * PP), compute_dtype)],
        compiler_params=pltpu.CompilerParams(dimension_semantics=("parallel",)),
    )(x, w_flat, shift)

    # (N, Cout, PP) -> NCHW: drop the lane padding and the KW-1 junk cols of each row.
    # TODO(synk): this final strided slice is the one remaining HBM glue copy (~16 KiB);
    # removing it would require an in-kernel relayout to W-wide rows that costs more in
    # XLU/lane-sparse stores than the copy it saves at these shapes.
    return out_flat[:, :, :P].reshape(N, Cout, Ho, Wp)[:, :, :, :Wo]


def _reference(x_nchw, weight, gamma, beta, running_mean, running_var,
               eps=1e-5, padding=1):
    conv = jax.lax.conv_general_dilated(
        x_nchw, weight, window_strides=(1, 1),
        padding=[(padding, padding), (padding, padding)],
        dimension_numbers=("NCHW", "OIHW", "NCHW"))
    bn = ((conv - running_mean[None, :, None, None])
          / jnp.sqrt(running_var + eps)[None, :, None, None]
          * gamma[None, :, None, None] + beta[None, :, None, None])
    return jnp.maximum(bn, 0.0)


if __name__ == "__main__":
    key = jax.random.PRNGKey(0)
    k1, k2, k3, k4, k5, k6 = jax.random.split(key, 6)

    N, Cin, H, W = 2, 4, 16, 16
    Cout, Ksz = 8, 3
    pad = (Ksz - 1) // 2   # get_padding(3, stride=1, dilation=1) == 1

    x = jax.random.normal(k1, (N, Cin, H, W), dtype=jnp.float32)
    weight = jax.random.normal(k2, (Cout, Cin, Ksz, Ksz), dtype=jnp.float32) * 0.1
    gamma = jax.random.uniform(k5, (Cout,), dtype=jnp.float32, minval=0.5, maxval=1.5)
    beta = jax.random.normal(k6, (Cout,), dtype=jnp.float32) * 0.1
    running_mean = jax.random.normal(k3, (Cout,), dtype=jnp.float32) * 0.1
    running_var = jax.random.uniform(k4, (Cout,), dtype=jnp.float32, minval=0.5, maxval=1.5)

    fn = jax.jit(functools.partial(conv_bn_act, stride=1, padding=pad))
    out = jax.block_until_ready(fn(x, weight, gamma, beta, running_mean, running_var))

    ref = _reference(x, weight, gamma, beta, running_mean, running_var, padding=pad)
    assert out.shape == (N, Cout, H, W), out.shape
    max_err = float(jnp.max(jnp.abs(out - ref)))
    assert jnp.allclose(out, ref, atol=1e-4, rtol=1e-4), max_err

    print("KERNEL_OK")
</pallas_src>

<mosaic_0001>
module attributes {stable_mosaic.version = 11 : i64} {
  func.func @kernel(%arg0: i32, %arg1: memref<2x8x432xf32, #tpu.memory_space<vmem>>, %arg2: memref<8x72xf32, #tpu.memory_space<vmem>>, %arg3: memref<8x1xf32, #tpu.memory_space<vmem>>, %arg4: memref<2x8x384xf32, #tpu.memory_space<vmem>>, %arg5: memref<72x768xf32, #tpu.memory_space<vmem>>) attributes {dimension_semantics = [#tpu.dimension_semantics<parallel>], iteration_bounds = array<i64: 1>, scalar_prefetch = 0 : i64, scratch_operands = 1 : i64, tpu.core_type = #tpu.core_type<tc>, window_params = [{transform_indices = @transform_0, window_bounds = array<i64: 2, 8, 432>}, {pipeline_mode = #tpu.pipeline_mode<synchronous>, transform_indices = @transform_1, window_bounds = array<i64: 8, 72>}, {pipeline_mode = #tpu.pipeline_mode<synchronous>, transform_indices = @transform_2, window_bounds = array<i64: 8, 1>}, {transform_indices = @transform_3, window_bounds = array<i64: 2, 8, 384>}]} {
    %c0 = arith.constant 0 : index
    %c0_0 = arith.constant 0 : index
    %c0_1 = arith.constant 0 : index
    %0 = vector.load %arg1[%c0, %c0_0, %c0_1] : memref<2x8x432xf32, #tpu.memory_space<vmem>>, vector<1x8x432xf32>
    %1 = vector.shape_cast %0 : vector<1x8x432xf32> to vector<8x432xf32>
    %2 = vector.extract_strided_slice %1 {offsets = [0, 0], sizes = [8, 384], strides = [1, 1]} : vector<8x432xf32> to vector<8x384xf32>
    %c0_2 = arith.constant 0 : index
    %c0_3 = arith.constant 0 : index
    %3 = vector.load %arg5[%c0_2, %c0_3] : memref<72x768xf32, #tpu.memory_space<vmem>>, vector<8x384xf32>
    tpu.vector_store %arg5[%c0_2, %c0_3], %2 {strides = array<i32>} : memref<72x768xf32, #tpu.memory_space<vmem>>, vector<8x384xf32>,
    %4 = vector.extract_strided_slice %1 {offsets = [0, 1], sizes = [8, 384], strides = [1, 1]} : vector<8x432xf32> to vector<8x384xf32>
    %c8 = arith.constant 8 : index
    %c0_4 = arith.constant 0 : index
    %5 = vector.load %arg5[%c8, %c0_4] : memref<72x768xf32, #tpu.memory_space<vmem>>, vector<8x384xf32>
    tpu.vector_store %arg5[%c8, %c0_4], %4 {strides = array<i32>} : memref<72x768xf32, #tpu.memory_space<vmem>>, vector<8x384xf32>,
    %6 = vector.extract_strided_slice %1 {offsets = [0, 2], sizes = [8, 384], strides = [1, 1]} : vector<8x432xf32> to vector<8x384xf32>
    %c16 = arith.constant 16 : index
    %c0_5 = arith.constant 0 : index
    %7 = vector.load %arg5[%c16, %c0_5] : memref<72x768xf32, #tpu.memory_space<vmem>>, vector<8x384xf32>
    tpu.vector_store %arg5[%c16, %c0_5], %6 {strides = array<i32>} : memref<72x768xf32, #tpu.memory_space<vmem>>, vector<8x384xf32>,
    %8 = vector.extract_strided_slice %1 {offsets = [0, 18], sizes = [8, 384], strides = [1, 1]} : vector<8x432xf32> to vector<8x384xf32>
    %c24 = arith.constant 24 : index
    %c0_6 = arith.constant 0 : index
    %9 = vector.load %arg5[%c24, %c0_6] : memref<72x768xf32, #tpu.memory_space<vmem>>, vector<8x384xf32>
    tpu.vector_store %arg5[%c24, %c0_6], %8 {strides = array<i32>} : memref<72x768xf32, #tpu.memory_space<vmem>>, vector<8x384xf32>,
    %10 = vector.extract_strided_slice %1 {offsets = [0, 19], sizes = [8, 384], strides = [1, 1]} : vector<8x432xf32> to vector<8x384xf32>
    %c32 = arith.constant 32 : index
    %c0_7 = arith.constant 0 : index
    %11 = vector.load %arg5[%c32, %c0_7] : memref<72x768xf32, #tpu.memory_space<vmem>>, vector<8x384xf32>
    tpu.vector_store %arg5[%c32, %c0_7], %10 {strides = array<i32>} : memref<72x768xf32, #tpu.memory_space<vmem>>, vector<8x384xf32>,
    %12 = vector.extract_strided_slice %1 {offsets = [0, 20], sizes = [8, 384], strides = [1, 1]} : vector<8x432xf32> to vector<8x384xf32>
    %c40 = arith.constant 40 : index
    %c0_8 = arith.constant 0 : index
    %13 = vector.load %arg5[%c40, %c0_8] : memref<72x768xf32, #tpu.memory_space<vmem>>, vector<8x384xf32>
    tpu.vector_store %arg5[%c40, %c0_8], %12 {strides = array<i32>} : memref<72x768xf32, #tpu.memory_space<vmem>>, vector<8x384xf32>,
    %14 = vector.extract_strided_slice %1 {offsets = [0, 36], sizes = [8, 384], strides = [1, 1]} : vector<8x432xf32> to vector<8x384xf32>
    %c48 = arith.constant 48 : index
    %c0_9 = arith.constant 0 : index
    %15 = vector.load %arg5[%c48, %c0_9] : memref<72x768xf32, #tpu.memory_space<vmem>>, vector<8x384xf32>
    tpu.vector_store %arg5[%c48, %c0_9], %14 {strides = array<i32>} : memref<72x768xf32, #tpu.memory_space<vmem>>, vector<8x384xf32>,
    %16 = vector.extract_strided_slice %1 {offsets = [0, 37], sizes = [8, 384], strides = [1, 1]} : vector<8x432xf32> to vector<8x384xf32>
    %c56 = arith.constant 56 : index
    %c0_10 = arith.constant 0 : index
    %17 = vector.load %arg5[%c56, %c0_10] : memref<72x768xf32, #tpu.memory_space<vmem>>, vector<8x384xf32>
    tpu.vector_store %arg5[%c56, %c0_10], %16 {strides = array<i32>} : memref<72x768xf32, #tpu.memory_space<vmem>>, vector<8x384xf32>,
    %18 = vector.extract_strided_slice %1 {offsets = [0, 38], sizes = [8, 384], strides = [1, 1]} : vector<8x432xf32> to vector<8x384xf32>
    %c64 = arith.constant 64 : index
    %c0_11 = arith.constant 0 : index
    %19 = vector.load %arg5[%c64, %c0_11] : memref<72x768xf32, #tpu.memory_space<vmem>>, vector<8x384xf32>
    tpu.vector_store %arg5[%c64, %c0_11], %18 {strides = array<i32>} : memref<72x768xf32, #tpu.memory_space<vmem>>, vector<8x384xf32>,
    %c1 = arith.constant 1 : index
    %c0_12 = arith.constant 0 : index
    %c0_13 = arith.constant 0 : index
    %20 = vector.load %arg1[%c1, %c0_12, %c0_13] : memref<2x8x432xf32, #tpu.memory_space<vmem>>, vector<1x8x432xf32>
    %21 = vector.shape_cast %20 : vector<1x8x432xf32> to vector<8x432xf32>
    %22 = vector.extract_strided_slice %21 {offsets = [0, 0], sizes = [8, 384], strides = [1, 1]} : vector<8x432xf32> to vector<8x384xf32>
    %c0_14 = arith.constant 0 : index
    %c384 = arith.constant 384 : index
    %23 = vector.load %arg5[%c0_14, %c384] : memref<72x768xf32, #tpu.memory_space<vmem>>, vector<8x384xf32>
    tpu.vector_store %arg5[%c0_14, %c384], %22 {strides = array<i32>} : memref<72x768xf32, #tpu.memory_space<vmem>>, vector<8x384xf32>,
    %24 = vector.extract_strided_slice %21 {offsets = [0, 1], sizes = [8, 384], strides = [1, 1]} : vector<8x432xf32> to vector<8x384xf32>
    %c8_15 = arith.constant 8 : index
    %c384_16 = arith.constant 384 : index
    %25 = vector.load %arg5[%c8_15, %c384_16] : memref<72x768xf32, #tpu.memory_space<vmem>>, vector<8x384xf32>
    tpu.vector_store %arg5[%c8_15, %c384_16], %24 {strides = array<i32>} : memref<72x768xf32, #tpu.memory_space<vmem>>, vector<8x384xf32>,
    %26 = vector.extract_strided_slice %21 {offsets = [0, 2], sizes = [8, 384], strides = [1, 1]} : vector<8x432xf32> to vector<8x384xf32>
    %c16_17 = arith.constant 16 : index
    %c384_18 = arith.constant 384 : index
    %27 = vector.load %arg5[%c16_17, %c384_18] : memref<72x768xf32, #tpu.memory_space<vmem>>, vector<8x384xf32>
    tpu.vector_store %arg5[%c16_17, %c384_18], %26 {strides = array<i32>} : memref<72x768xf32, #tpu.memory_space<vmem>>, vector<8x384xf32>,
    %28 = vector.extract_strided_slice %21 {offsets = [0, 18], sizes = [8, 384], strides = [1, 1]} : vector<8x432xf32> to vector<8x384xf32>
    %c24_19 = arith.constant 24 : index
    %c384_20 = arith.constant 384 : index
    %29 = vector.load %arg5[%c24_19, %c384_20] : memref<72x768xf32, #tpu.memory_space<vmem>>, vector<8x384xf32>
    tpu.vector_store %arg5[%c24_19, %c384_20], %28 {strides = array<i32>} : memref<72x768xf32, #tpu.memory_space<vmem>>, vector<8x384xf32>,
    %30 = vector.extract_strided_slice %21 {offsets = [0, 19], sizes = [8, 384], strides = [1, 1]} : vector<8x432xf32> to vector<8x384xf32>
    %c32_21 = arith.constant 32 : index
    %c384_22 = arith.constant 384 : index
    %31 = vector.load %arg5[%c32_21, %c384_22] : memref<72x768xf32, #tpu.memory_space<vmem>>, vector<8x384xf32>
    tpu.vector_store %arg5[%c32_21, %c384_22], %30 {strides = array<i32>} : memref<72x768xf32, #tpu.memory_space<vmem>>, vector<8x384xf32>,
    %32 = vector.extract_strided_slice %21 {offsets = [0, 20], sizes = [8, 384], strides = [1, 1]} : vector<8x432xf32> to vector<8x384xf32>
    %c40_23 = arith.constant 40 : index
    %c384_24 = arith.constant 384 : index
    %33 = vector.load %arg5[%c40_23, %c384_24] : memref<72x768xf32, #tpu.memory_space<vmem>>, vector<8x384xf32>
    tpu.vector_store %arg5[%c40_23, %c384_24], %32 {strides = array<i32>} : memref<72x768xf32, #tpu.memory_space<vmem>>, vector<8x384xf32>,
    %34 = vector.extract_strided_slice %21 {offsets = [0, 36], sizes = [8, 384], strides = [1, 1]} : vector<8x432xf32> to vector<8x384xf32>
    %c48_25 = arith.constant 48 : index
    %c384_26 = arith.constant 384 : index
    %35 = vector.load %arg5[%c48_25, %c384_26] : memref<72x768xf32, #tpu.memory_space<vmem>>, vector<8x384xf32>
    tpu.vector_store %arg5[%c48_25, %c384_26], %34 {strides = array<i32>} : memref<72x768xf32, #tpu.memory_space<vmem>>, vector<8x384xf32>,
    %36 = vector.extract_strided_slice %21 {offsets = [0, 37], sizes = [8, 384], strides = [1, 1]} : vector<8x432xf32> to vector<8x384xf32>
    %c56_27 = arith.constant 56 : index
    %c384_28 = arith.constant 384 : index
    %37 = vector.load %arg5[%c56_27, %c384_28] : memref<72x768xf32, #tpu.memory_space<vmem>>, vector<8x384xf32>
    tpu.vector_store %arg5[%c56_27, %c384_28], %36 {strides = array<i32>} : memref<72x768xf32, #tpu.memory_space<vmem>>, vector<8x384xf32>,
    %38 = vector.extract_strided_slice %21 {offsets = [0, 38], sizes = [8, 384], strides = [1, 1]} : vector<8x432xf32> to vector<8x384xf32>
    %c64_29 = arith.constant 64 : index
    %c384_30 = arith.constant 384 : index
    %39 = vector.load %arg5[%c64_29, %c384_30] : memref<72x768xf32, #tpu.memory_space<vmem>>, vector<8x384xf32>
    tpu.vector_store %arg5[%c64_29, %c384_30], %38 {strides = array<i32>} : memref<72x768xf32, #tpu.memory_space<vmem>>, vector<8x384xf32>,
    %c0_31 = arith.constant 0 : index
    %c0_32 = arith.constant 0 : index
    %40 = vector.load %arg2[%c0_31, %c0_32] : memref<8x72xf32, #tpu.memory_space<vmem>>, vector<8x72xf32>
    %c0_33 = arith.constant 0 : index
    %c0_34 = arith.constant 0 : index
    %41 = vector.load %arg5[%c0_33, %c0_34] : memref<72x768xf32, #tpu.memory_space<vmem>>, vector<72x768xf32>
    %cst = arith.constant dense<0.000000e+00> : vector<8x768xf32>
    %42 = tpu.matmul %40, %41, %cst {dimension_numbers = #tpu.dot_dimension_numbers<[1], [0], [0], [1], [0, 0, 1, 1], [], []>} : vector<8x72xf32>, vector<72x768xf32>, vector<8x768xf32> -> vector<8x768xf32>
    %c0_35 = arith.constant 0 : index
    %c0_36 = arith.constant 0 : index
    %43 = vector.load %arg3[%c0_35, %c0_36] : memref<8x1xf32, #tpu.memory_space<vmem>>, vector<8x1xf32>
    %44 = vector.broadcast %43 : vector<8x1xf32> to vector<8x768xf32>
    %45 = arith.addf %42, %44 : vector<8x768xf32>
    %cst_37 = arith.constant 0.000000e+00 : f32
    %46 = vector.broadcast %cst_37 : f32 to vector<8x768xf32>
    %47 = arith.maximumf %45, %46 : vector<8x768xf32>
    %48 = vector.extract_strided_slice %47 {offsets = [0, 0], sizes = [8, 384], strides = [1, 1]} : vector<8x768xf32> to vector<8x384xf32>
    %c0_38 = arith.constant 0 : index
    %c0_39 = arith.constant 0 : index
    %c0_40 = arith.constant 0 : index
    %49 = vector.load %arg4[%c0_38, %c0_39, %c0_40] : memref<2x8x384xf32, #tpu.memory_space<vmem>>, vector<1x8x384xf32>
    %50 = vector.shape_cast %49 : vector<1x8x384xf32> to vector<8x384xf32>
    %51 = vector.shape_cast %48 : vector<8x384xf32> to vector<1x8x384xf32>
    tpu.vector_store %arg4[%c0_38, %c0_39, %c0_40], %51 {strides = array<i32>} : memref<2x8x384xf32, #tpu.memory_space<vmem>>, vector<1x8x384xf32>,
    %52 = vector.extract_strided_slice %47 {offsets = [0, 384], sizes = [8, 384], strides = [1, 1]} : vector<8x768xf32> to vector<8x384xf32>
    %c1_41 = arith.constant 1 : index
    %c0_42 = arith.constant 0 : index
    %c0_43 = arith.constant 0 : index
    %53 = vector.load %arg4[%c1_41, %c0_42, %c0_43] : memref<2x8x384xf32, #tpu.memory_space<vmem>>, vector<1x8x384xf32>
    %54 = vector.shape_cast %53 : vector<1x8x384xf32> to vector<8x384xf32>
    %55 = vector.shape_cast %52 : vector<8x384xf32> to vector<1x8x384xf32>
    tpu.vector_store %arg4[%c1_41, %c0_42, %c0_43], %55 {strides = array<i32>} : memref<2x8x384xf32, #tpu.memory_space<vmem>>, vector<1x8x384xf32>,
    return
  }
  func.func @transform_0(%arg0: i32) -> (i32, i32, i32) {
    %c0_i32 = arith.constant 0 : i32
    %c0_i32_0 = arith.constant 0 : i32
    %c0_i32_1 = arith.constant 0 : i32
    return %arg0, %c0_i32, %c0_i32_0 : i32, i32, i32
  }
  func.func @transform_1(%arg0: i32) -> (i32, i32) {
    %c0_i32 = arith.constant 0 : i32
    %c0_i32_0 = arith.constant 0 : i32
    %c0_i32_1 = arith.constant 0 : i32
    return %c0_i32, %c0_i32_0 : i32, i32
  }
  func.func @transform_2(%arg0: i32) -> (i32, i32) {
    %c0_i32 = arith.constant 0 : i32
    %c0_i32_0 = arith.constant 0 : i32
    %c0_i32_1 = arith.constant 0 : i32
    return %c0_i32, %c0_i32_0 : i32, i32
  }
  func.func @transform_3(%arg0: i32) -> (i32, i32, i32) {
    %c0_i32 = arith.constant 0 : i32
    %c0_i32_0 = arith.constant 0 : i32
    %c0_i32_1 = arith.constant 0 : i32
    return %arg0, %c0_i32, %c0_i32_0 : i32, i32, i32
  }
}

</mosaic_0001>

<llo_original>
// kernel: conv_bn_act.1
$region0: #{conv_bn_act.1}
  #allocation0 [shape = 'u32[]', space=smem, size = 0x4, offset = 0x4, fixed_abs, tag = 'smem constant byte address 0x4 - core index']
  #allocation1 [shape = 'u32[144,128]{1,0:T(1,128)}', space=vmem, size = 0x12000, scoped, tag = 'internal scratch']
  #allocation2 [shape = 'f32[72,768]{1,0:T(8,128)}', space=vmem, size = 0x36000, scoped, tag = 'scratch operand']
  %s0 = inlined_call_operand.vmem [shape: f32[2,8,432], index: 0, kind: input, shape index: {}]
  %s1 = inlined_call_operand.vmem [shape: f32[8,72], index: 1, kind: input, shape index: {}]
  %s2 = inlined_call_operand.vmem [shape: f32[8,1], index: 2, kind: input, shape index: {}]
  %s3 = inlined_call_operand.vmem [shape: f32[2,8,384], index: 3, kind: output, shape index: {}]
  %s4 = sld [smem:[#allocation0]]
  $region22: #{conv_bn_act.1} parent=0
    _
  %s6 = ssub.s32 1, %s4
  %s7 = scalar_select 0, %s6, %s4
  // Predicated region
  $region2: #{conv_bn_act.1} parent=0 // pred_check
    _
  $region3: #{conv_bn_act.1} parent=0 // pred_check_branch
    %9 = sbr.rel (0) target = $region5
  $region4: #{conv_bn_act.1} parent=0 // pred_region
    _
  $region5: #{conv_bn_act.1} parent=0 // pred_fallthru
    _
  // Predicated region
  $region6: #{conv_bn_act.1} parent=0 // pred_check
    _
  $region7: #{conv_bn_act.1} parent=0 // pred_check_branch
    %11 = sbr.rel (0) target = $region9
  $region8: #{conv_bn_act.1} parent=0 // pred_region
    _
  $region9: #{conv_bn_act.1} parent=0 // pred_fallthru
    _
  // Predicated region
  $region10: #{conv_bn_act.1} parent=0 // pred_check
    _
  $region11: #{conv_bn_act.1} parent=0 // pred_check_branch
    %13 = sbr.rel (0) target = $region13
  $region12: #{conv_bn_act.1} parent=0 // pred_region
    _
  $region13: #{conv_bn_act.1} parent=0 // pred_fallthru
    _
  %v14 = vld [vmem:[%s0] sm:$0xff]
  %v15 = vld [vmem:[%s0 + $0x8] sm:$0xff]
  %v16 = vld [vmem:[%s0 + $0x10] sm:$0xff]
  %v17 = vld [vmem:[%s0 + $0x18] sm:$0xff]
  %18 = vst [vmem:[#allocation2] sm:$0xff] %v14
  %19 = vst [vmem:[#allocation2 + $0x8] sm:$0xff] %v15
  %20 = vst [vmem:[#allocation2 + $0x10] sm:$0xff] %v16
  %25 = vrot.lane.b32.xlu0 %v14, 127
  %v26 = vpop.permute.xlu0 %25
  %27 = vrot.lane.b32.xlu0 %v15, 127
  %v28 = vpop.permute.xlu0 %27
  %29 = vrot.lane.b32.xlu0 %v16, 127
  %v30 = vpop.permute.xlu0 %29
  %31 = vrot.lane.b32.xlu0 %v17, 127
  %v32 = vpop.permute.xlu0 %31
  %vm33 = vcmask 1039360
  %v34 = vsel %vm33, %v26, %v28
  %v35 = vsel %vm33, %v28, %v30
  %v36 = vsel %vm33, %v30, %v32
  %40 = vst [vmem:[#allocation2 + $0x30] sm:$0xff] %v34
  %41 = vst [vmem:[#allocation2 + $0x38] sm:$0xff] %v35
  %42 = vst [vmem:[#allocation2 + $0x40] sm:$0xff] %v36
  %43 = vrot.lane.b32.xlu0 %v14, 126
  %v44 = vpop.permute.xlu0 %43
  %45 = vrot.lane.b32.xlu0 %v15, 126
  %v46 = vpop.permute.xlu0 %45
  %47 = vrot.lane.b32.xlu0 %v16, 126
  %v48 = vpop.permute.xlu0 %47
  %49 = vrot.lane.b32.xlu0 %v17, 126
  %v50 = vpop.permute.xlu0 %49
  %vm51 = vcmask 1031168
  %v52 = vsel %vm51, %v44, %v46
  %v53 = vsel %vm51, %v46, %v48
  %v54 = vsel %vm51, %v48, %v50
  %58 = vst [vmem:[#allocation2 + $0x60] sm:$0xff] %v52
  %59 = vst [vmem:[#allocation2 + $0x68] sm:$0xff] %v53
  %60 = vst [vmem:[#allocation2 + $0x70] sm:$0xff] %v54
  %61 = vrot.lane.b32.xlu0 %v14, 110
  %v62 = vpop.permute.xlu0 %61
  %63 = vrot.lane.b32.xlu0 %v15, 110
  %v64 = vpop.permute.xlu0 %63
  %65 = vrot.lane.b32.xlu0 %v16, 110
  %v66 = vpop.permute.xlu0 %65
  %67 = vrot.lane.b32.xlu0 %v17, 110
  %v68 = vpop.permute.xlu0 %67
  %vm69 = vcmask 900096
  %v70 = vsel %vm69, %v62, %v64
  %v71 = vsel %vm69, %v64, %v66
  %v72 = vsel %vm69, %v66, %v68
  %76 = vst [vmem:[#allocation2 + $0x90] sm:$0xff] %v70
  %77 = vst [vmem:[#allocation2 + $0x98] sm:$0xff] %v71
  %78 = vst [vmem:[#allocation2 + $0xa0] sm:$0xff] %v72
  %79 = vrot.lane.b32.xlu0 %v14, 109
  %v80 = vpop.permute.xlu0 %79
  %81 = vrot.lane.b32.xlu0 %v15, 109
  %v82 = vpop.permute.xlu0 %81
  %83 = vrot.lane.b32.xlu0 %v16, 109
  %v84 = vpop.permute.xlu0 %83
  %85 = vrot.lane.b32.xlu0 %v17, 109
  %v86 = vpop.permute.xlu0 %85
  %vm87 = vcmask 891904
  %v88 = vsel %vm87, %v80, %v82
  %v89 = vsel %vm87, %v82, %v84
  %v90 = vsel %vm87, %v84, %v86
  %94 = vst [vmem:[#allocation2 + $0xc0] sm:$0xff] %v88
  %95 = vst [vmem:[#allocation2 + $0xc8] sm:$0xff] %v89
  %96 = vst [vmem:[#allocation2 + $0xd0] sm:$0xff] %v90
  %97 = vrot.lane.b32.xlu0 %v14, 108
  %v98 = vpop.permute.xlu0 %97
  %99 = vrot.lane.b32.xlu0 %v15, 108
  %v100 = vpop.permute.xlu0 %99
  %101 = vrot.lane.b32.xlu0 %v16, 108
  %v102 = vpop.permute.xlu0 %101
  %103 = vrot.lane.b32.xlu0 %v17, 108
  %v104 = vpop.permute.xlu0 %103
  %vm105 = vcmask 883712
  %v106 = vsel %vm105, %v98, %v100
  %v107 = vsel %vm105, %v100, %v102
  %v108 = vsel %vm105, %v102, %v104
  %112 = vst [vmem:[#allocation2 + $0xf0] sm:$0xff] %v106
  %113 = vst [vmem:[#allocation2 + $0xf8] sm:$0xff] %v107
  %114 = vst [vmem:[#allocation2 + $0x100] sm:$0xff] %v108
  %115 = vrot.lane.b32.xlu0 %v14, 92
  %v116 = vpop.permute.xlu0 %115
  %117 = vrot.lane.b32.xlu0 %v15, 92
  %v118 = vpop.permute.xlu0 %117
  %119 = vrot.lane.b32.xlu0 %v16, 92
  %v120 = vpop.permute.xlu0 %119
  %121 = vrot.lane.b32.xlu0 %v17, 92
  %v122 = vpop.permute.xlu0 %121
  %vm123 = vcmask 752640
  %v124 = vsel %vm123, %v116, %v118
  %v125 = vsel %vm123, %v118, %v120
  %v126 = vsel %vm123, %v120, %v122
  %130 = vst [vmem:[#allocation2 + $0x120] sm:$0xff] %v124
  %131 = vst [vmem:[#allocation2 + $0x128] sm:$0xff] %v125
  %132 = vst [vmem:[#allocation2 + $0x130] sm:$0xff] %v126
  %133 = vrot.lane.b32.xlu0 %v14, 91
  %v134 = vpop.permute.xlu0 %133
  %135 = vrot.lane.b32.xlu0 %v15, 91
  %v136 = vpop.permute.xlu0 %135
  %137 = vrot.lane.b32.xlu0 %v16, 91
  %v138 = vpop.permute.xlu0 %137
  %139 = vrot.lane.b32.xlu0 %v17, 91
  %v140 = vpop.permute.xlu0 %139
  %vm141 = vcmask 744448
  %v142 = vsel %vm141, %v134, %v136
  %v143 = vsel %vm141, %v136, %v138
  %v144 = vsel %vm141, %v138, %v140
  %148 = vst [vmem:[#allocation2 + $0x150] sm:$0xff] %v142
  %149 = vst [vmem:[#allocation2 + $0x158] sm:$0xff] %v143
  %150 = vst [vmem:[#allocation2 + $0x160] sm:$0xff] %v144
  %151 = vrot.lane.b32.xlu0 %v14, 90
  %v152 = vpop.permute.xlu0 %151
  %153 = vrot.lane.b32.xlu0 %v15, 90
  %v154 = vpop.permute.xlu0 %153
  %155 = vrot.lane.b32.xlu0 %v16, 90
  %v156 = vpop.permute.xlu0 %155
  %157 = vrot.lane.b32.xlu0 %v17, 90
  %v158 = vpop.permute.xlu0 %157
  %vm159 = vcmask 736256
  %v160 = vsel %vm159, %v152, %v154
  %v161 = vsel %vm159, %v154, %v156
  %v162 = vsel %vm159, %v156, %v158
  %166 = vst [vmem:[#allocation2 + $0x180] sm:$0xff] %v160
  %167 = vst [vmem:[#allocation2 + $0x188] sm:$0xff] %v161
  %168 = vst [vmem:[#allocation2 + $0x190] sm:$0xff] %v162
  %s169 = scalar_lea.vmem %s0, 32
  %v170 = vld [vmem:[%s169] sm:$0xff]
  %v171 = vld [vmem:[%s169 + $0x8] sm:$0xff]
  %v172 = vld [vmem:[%s169 + $0x10] sm:$0xff]
  %v173 = vld [vmem:[%s169 + $0x18] sm:$0xff]
  %174 = vst [vmem:[#allocation2 + $0x18] sm:$0xff] %v170
  %175 = vst [vmem:[#allocation2 + $0x20] sm:$0xff] %v171
  %176 = vst [vmem:[#allocation2 + $0x28] sm:$0xff] %v172
  %181 = vrot.lane.b32.xlu0 %v170, 127
  %v182 = vpop.permute.xlu0 %181
  %183 = vrot.lane.b32.xlu0 %v171, 127
  %v184 = vpop.permute.xlu0 %183
  %185 = vrot.lane.b32.xlu0 %v172, 127
  %v186 = vpop.permute.xlu0 %185
  %187 = vrot.lane.b32.xlu0 %v173, 127
  %v188 = vpop.permute.xlu0 %187
  %v189 = vsel %vm33, %v182, %v184
  %v190 = vsel %vm33, %v184, %v186
  %v191 = vsel %vm33, %v186, %v188
  %195 = vst [vmem:[#allocation2 + $0x48] sm:$0xff] %v189
  %196 = vst [vmem:[#allocation2 + $0x50] sm:$0xff] %v190
  %197 = vst [vmem:[#allocation2 + $0x58] sm:$0xff] %v191
  %198 = vrot.lane.b32.xlu0 %v170, 126
  %v199 = vpop.permute.xlu0 %198
  %200 = vrot.lane.b32.xlu0 %v171, 126
  %v201 = vpop.permute.xlu0 %200
  %202 = vrot.lane.b32.xlu0 %v172, 126
  %v203 = vpop.permute.xlu0 %202
  %204 = vrot.lane.b32.xlu0 %v173, 126
  %v205 = vpop.permute.xlu0 %204
  %v206 = vsel %vm51, %v199, %v201
  %v207 = vsel %vm51, %v201, %v203
  %v208 = vsel %vm51, %v203, %v205
  %212 = vst [vmem:[#allocation2 + $0x78] sm:$0xff] %v206
  %213 = vst [vmem:[#allocation2 + $0x80] sm:$0xff] %v207
  %214 = vst [vmem:[#allocation2 + $0x88] sm:$0xff] %v208
  %215 = vrot.lane.b32.xlu0 %v170, 110
  %v216 = vpop.permute.xlu0 %215
  %217 = vrot.lane.b32.xlu0 %v171, 110
  %v218 = vpop.permute.xlu0 %217
  %219 = vrot.lane.b32.xlu0 %v172, 110
  %v220 = vpop.permute.xlu0 %219
  %221 = vrot.lane.b32.xlu0 %v173, 110
  %v222 = vpop.permute.xlu0 %221
  %v223 = vsel %vm69, %v216, %v218
  %v224 = vsel %vm69, %v218, %v220
  %v225 = vsel %vm69, %v220, %v222
  %229 = vst [vmem:[#allocation2 + $0xa8] sm:$0xff] %v223
  %230 = vst [vmem:[#allocation2 + $0xb0] sm:$0xff] %v224
  %231 = vst [vmem:[#allocation2 + $0xb8] sm:$0xff] %v225
  %232 = vrot.lane.b32.xlu0 %v170, 109
  %v233 = vpop.permute.xlu0 %232
  %234 = vrot.lane.b32.xlu0 %v171, 109
  %v235 = vpop.permute.xlu0 %234
  %236 = vrot.lane.b32.xlu0 %v172, 109
  %v237 = vpop.permute.xlu0 %236
  %238 = vrot.lane.b32.xlu0 %v173, 109
  %v239 = vpop.permute.xlu0 %238
  %v240 = vsel %vm87, %v233, %v235
  %v241 = vsel %vm87, %v235, %v237
  %v242 = vsel %vm87, %v237, %v239
  %246 = vst [vmem:[#allocation2 + $0xd8] sm:$0xff] %v240
  %247 = vst [vmem:[#allocation2 + $0xe0] sm:$0xff] %v241
  %248 = vst [vmem:[#allocation2 + $0xe8] sm:$0xff] %v242
  %249 = vrot.lane.b32.xlu0 %v170, 108
  %v250 = vpop.permute.xlu0 %249
  %251 = vrot.lane.b32.xlu0 %v171, 108
  %v252 = vpop.permute.xlu0 %251
  %253 = vrot.lane.b32.xlu0 %v172, 108
  %v254 = vpop.permute.xlu0 %253
  %255 = vrot.lane.b32.xlu0 %v173, 108
  %v256 = vpop.permute.xlu0 %255
  %v257 = vsel %vm105, %v250, %v252
  %v258 = vsel %vm105, %v252, %v254
  %v259 = vsel %vm105, %v254, %v256
  %263 = vst [vmem:[#allocation2 + $0x108] sm:$0xff] %v257
  %264 = vst [vmem:[#allocation2 + $0x110] sm:$0xff] %v258
  %265 = vst [vmem:[#allocation2 + $0x118] sm:$0xff] %v259
  %266 = vrot.lane.b32.xlu0 %v170, 92
  %v267 = vpop.permute.xlu0 %266
  %268 = vrot.lane.b32.xlu0 %v171, 92
  %v269 = vpop.permute.xlu0 %268
  %270 = vrot.lane.b32.xlu0 %v172, 92
  %v271 = vpop.permute.xlu0 %270
  %272 = vrot.lane.b32.xlu0 %v173, 92
  %v273 = vpop.permute.xlu0 %272
  %v274 = vsel %vm123, %v267, %v269
  %v275 = vsel %vm123, %v269, %v271
  %v276 = vsel %vm123, %v271, %v273
  %280 = vst [vmem:[#allocation2 + $0x138] sm:$0xff] %v274
  %281 = vst [vmem:[#allocation2 + $0x140] sm:$0xff] %v275
  %282 = vst [vmem:[#allocation2 + $0x148] sm:$0xff] %v276
  %283 = vrot.lane.b32.xlu0 %v170, 91
  %v284 = vpop.permute.xlu0 %283
  %285 = vrot.lane.b32.xlu0 %v171, 91
  %v286 = vpop.permute.xlu0 %285
  %287 = vrot.lane.b32.xlu0 %v172, 91
  %v288 = vpop.permute.xlu0 %287
  %289 = vrot.lane.b32.xlu0 %v173, 91
  %v290 = vpop.permute.xlu0 %289
  %v291 = vsel %vm141, %v284, %v286
  %v292 = vsel %vm141, %v286, %v288
  %v293 = vsel %vm141, %v288, %v290
  %297 = vst [vmem:[#allocation2 + $0x168] sm:$0xff] %v291
  %298 = vst [vmem:[#allocation2 + $0x170] sm:$0xff] %v292
  %299 = vst [vmem:[#allocation2 + $0x178] sm:$0xff] %v293
  %300 = vrot.lane.b32.xlu0 %v170, 90
  %v301 = vpop.permute.xlu0 %300
  %302 = vrot.lane.b32.xlu0 %v171, 90
  %v303 = vpop.permute.xlu0 %302
  %304 = vrot.lane.b32.xlu0 %v172, 90
  %v305 = vpop.permute.xlu0 %304
  %306 = vrot.lane.b32.xlu0 %v173, 90
  %v307 = vpop.permute.xlu0 %306
  %v308 = vsel %vm159, %v301, %v303
  %v309 = vsel %vm159, %v303, %v305
  %v310 = vsel %vm159, %v305, %v307
  %314 = vst [vmem:[#allocation2 + $0x198] sm:$0xff] %v308
  %315 = vst [vmem:[#allocation2 + $0x1a0] sm:$0xff] %v309
  %316 = vst [vmem:[#allocation2 + $0x1a8] sm:$0xff] %v310
  %v317 = vld [vmem:[%s1] sm:$0xff]
  %v318 = vld [vmem:[#allocation2] sm:$0xff]
  %v319 = vld [vmem:[#allocation2 + $0x8] sm:$0xff]
  %v320 = vld [vmem:[#allocation2 + $0x10] sm:$0xff]
  %v321 = vld [vmem:[#allocation2 + $0x18] sm:$0xff]
  %v322 = vld [vmem:[#allocation2 + $0x20] sm:$0xff]
  %v323 = vld [vmem:[#allocation2 + $0x28] sm:$0xff]
  %v324 = vld [vmem:[#allocation2 + $0x30] sm:$0xff]
  %v325 = vld [vmem:[#allocation2 + $0x38] sm:$0xff]
  %v326 = vld [vmem:[#allocation2 + $0x40] sm:$0xff]
  %v327 = vld [vmem:[#allocation2 + $0x48] sm:$0xff]
  %v328 = vld [vmem:[#allocation2 + $0x50] sm:$0xff]
  %v329 = vld [vmem:[#allocation2 + $0x58] sm:$0xff]
  %v330 = vld [vmem:[#allocation2 + $0x60] sm:$0xff]
  %v331 = vld [vmem:[#allocation2 + $0x68] sm:$0xff]
  %v332 = vld [vmem:[#allocation2 + $0x70] sm:$0xff]
  %v333 = vld [vmem:[#allocation2 + $0x78] sm:$0xff]
  %v334 = vld [vmem:[#allocation2 + $0x80] sm:$0xff]
  %v335 = vld [vmem:[#allocation2 + $0x88] sm:$0xff]
  %v336 = vld [vmem:[#allocation2 + $0x90] sm:$0xff]
  %v337 = vld [vmem:[#allocation2 + $0x98] sm:$0xff]
  %v338 = vld [vmem:[#allocation2 + $0xa0] sm:$0xff]
  %v339 = vld [vmem:[#allocation2 + $0xa8] sm:$0xff]
  %v340 = vld [vmem:[#allocation2 + $0xb0] sm:$0xff]
  %v341 = vld [vmem:[#allocation2 + $0xb8] sm:$0xff]
  %v342 = vld [vmem:[#allocation2 + $0xc0] sm:$0xff]
  %v343 = vld [vmem:[#allocation2 + $0xc8] sm:$0xff]
  %v344 = vld [vmem:[#allocation2 + $0xd0] sm:$0xff]
  %v345 = vld [vmem:[#allocation2 + $0xd8] sm:$0xff]
  %v346 = vld [vmem:[#allocation2 + $0xe0] sm:$0xff]
  %v347 = vld [vmem:[#allocation2 + $0xe8] sm:$0xff]
  %v348 = vld [vmem:[#allocation2 + $0xf0] sm:$0xff]
  %v349 = vld [vmem:[#allocation2 + $0xf8] sm:$0xff]
  %v350 = vld [vmem:[#allocation2 + $0x100] sm:$0xff]
  %v351 = vld [vmem:[#allocation2 + $0x108] sm:$0xff]
  %v352 = vld [vmem:[#allocation2 + $0x110] sm:$0xff]
  %v353 = vld [vmem:[#allocation2 + $0x118] sm:$0xff]
  %v354 = vld [vmem:[#allocation2 + $0x120] sm:$0xff]
  %v355 = vld [vmem:[#allocation2 + $0x128] sm:$0xff]
  %v356 = vld [vmem:[#allocation2 + $0x130] sm:$0xff]
  %v357 = vld [vmem:[#allocation2 + $0x138] sm:$0xff]
  %v358 = vld [vmem:[#allocation2 + $0x140] sm:$0xff]
  %v359 = vld [vmem:[#allocation2 + $0x148] sm:$0xff]
  %v360 = vld [vmem:[#allocation2 + $0x150] sm:$0xff]
  %v361 = vld [vmem:[#allocation2 + $0x158] sm:$0xff]
  %v362 = vld [vmem:[#allocation2 + $0x160] sm:$0xff]
  %v363 = vld [vmem:[#allocation2 + $0x168] sm:$0xff]
  %v364 = vld [vmem:[#allocation2 + $0x170] sm:$0xff]
  %v365 = vld [vmem:[#allocation2 + $0x178] sm:$0xff]
  %v366 = vld [vmem:[#allocation2 + $0x180] sm:$0xff]
  %v367 = vld [vmem:[#allocation2 + $0x188] sm:$0xff]
  %v368 = vld [vmem:[#allocation2 + $0x190] sm:$0xff]
  %v369 = vld [vmem:[#allocation2 + $0x198] sm:$0xff]
  %v370 = vld [vmem:[#allocation2 + $0x1a0] sm:$0xff]
  %v371 = vld [vmem:[#allocation2 + $0x1a8] sm:$0xff]
  %v372 = vld [vmem:[%s2] sm:$0xff]
  %374 = vset.pattern.permute.xlu0 0
  %375 = vperm.xlu0 %374, %v372
  %v376 = vpop.permute.xlu0 %375
  %vm378 = vcmask 588800
  %v380 = vsel %vm378, %v317, 0
  %382 = vmatprep.subr.mxu0 %v319
  %383 = vmatpush1.msra.mxu0 %v318
  %384 = vmatprep.subr.mxu0 %v325
  %385 = vmatpush1.msra.mxu0 %v324
  %386 = vmatprep.subr.mxu0 %v331
  %387 = vmatpush1.msra.mxu0 %v330
  %388 = vmatprep.subr.mxu0 %v337
  %389 = vmatpush1.msra.mxu0 %v336
  %390 = vmatprep.subr.mxu0 %v343
  %391 = vmatpush1.msra.mxu0 %v342
  %392 = vmatprep.subr.mxu0 %v349
  %393 = vmatpush1.msra.mxu0 %v348
  %394 = vmatprep.subr.mxu0 %v355
  %395 = vmatpush1.msra.mxu0 %v354
  %396 = vmatprep.subr.mxu0 %v361
  %397 = vmatpush1.msra.mxu0 %v360
  %398 = vmatprep.subr.mxu0 %v367
  %399 = vmatpush1.msra.mxu0 %v366
  %400 = vmatprep.subr.mxu0 0.0
  %401 = vmatpush1.msra.mxu0 0.0
  %402 = vmatprep.subr.mxu0 0.0
  %403 = vmatpush1.msra.mxu0 0.0
  %404 = vmatprep.subr.mxu0 0.0
  %405 = vmatpush1.msra.mxu0 0.0
  %406 = vmatprep.subr.mxu0 0.0
  %407 = vmatpush1.msra.mxu0 0.0
  %408 = vmatprep.subr.mxu0 0.0
  %409 = vmatpush1.msra.mxu0 0.0
  %410 = vmatprep.subr.mxu0 0.0
  %411 = vmatpush1.msra.mxu0 0.0
  %412 = vmatprep.subr.mxu0 0.0
  %413 = vmatpush1.msra.mxu0 0.0
  %414 = vmatprep.subr.mxu0 0.0
  %415 = vmatpush1.msra.mxu0 0.0
  %416 = vmatprep.subr.mxu0 0.0
  %417 = vmatpush1.msra.mxu0 0.0
  %418 = vmatprep.subr.mxu0 0.0
  %419 = vmatpush1.msra.mxu0 0.0
  %420 = vmatprep.subr.mxu0 0.0
  %421 = vmatpush1.msra.mxu0 0.0
  %422 = vmatprep.subr.mxu0 0.0
  %423 = vmatpush1.msra.mxu0 0.0
  %424 = vmatprep.subr.mxu0 0.0
  %425 = vmatpush1.msra.mxu0 0.0
  %426 = vmatprep.subr.mxu0 0.0
  %427 = vmatpush1.msra.mxu0 0.0
  %428 = vmatprep.subr.mxu0 0.0
  %429 = vmatpush1.msra.mxu0 0.0
  %430 = vmatprep.subr.mxu0 0.0
  %431 = vmatpush1.msra.mxu0 0.0
  %432 = vmatprep.subr.mxu0 0.0
  %433 = vmatpush1.msra.mxu0 0.0
  %434 = vmatprep.subr.mxu0 0.0
  %435 = vmatpush1.msra.mxu0 0.0
  %436 = vmatprep.subr.mxu0 0.0
  %437 = vmatpush1.msra.mxu0 0.0
  %438 = vmatprep.subr.mxu0 0.0
  %439 = vmatpush1.msra.mxu0 0.0
  %440 = vmatprep.subr.mxu0 0.0
  %441 = vmatpush1.msra.mxu0 0.0
  %442 = vmatprep.subr.mxu0 0.0
  %443 = vmatpush1.msra.mxu0 0.0
  %444 = vmatprep.subr.mxu0 0.0
  %445 = vmatpush1.msra.mxu0 0.0
  %446 = vmatprep.mubr.f32.mxu0 0.0
  %447 = vmatmul.mubr.f32.gmra.mrb[0].mxu0 %v380
  %v448 = vpop.f32.mrb[0].mxu0
  %v449 = vadd.f32 %v376, %v448
  %v450 = vpop.f32.mrb[0].mxu0
  %v451 = vadd.f32 %v376, %v450
  %452 = vdwg.mxu0
  %453 = vmatprep.subr.mxu0 %v321
  %454 = vmatpush1.msra.mxu0 %v320
  %455 = vmatprep.subr.mxu0 %v327
  %456 = vmatpush1.msra.mxu0 %v326
  %457 = vmatprep.subr.mxu0 %v333
  %458 = vmatpush1.msra.mxu0 %v332
  %459 = vmatprep.subr.mxu0 %v339
  %460 = vmatpush1.msra.mxu0 %v338
  %461 = vmatprep.subr.mxu0 %v345
  %462 = vmatpush1.msra.mxu0 %v344
  %463 = vmatprep.subr.mxu0 %v351
  %464 = vmatpush1.msra.mxu0 %v350
  %465 = vmatprep.subr.mxu0 %v357
  %466 = vmatpush1.msra.mxu0 %v356
  %467 = vmatprep.subr.mxu0 %v363
  %468 = vmatpush1.msra.mxu0 %v362
  %469 = vmatprep.subr.mxu0 %v369
  %470 = vmatpush1.msra.mxu0 %v368
  %471 = vmatprep.subr.mxu0 0.0
  %472 = vmatpush1.msra.mxu0 0.0
  %473 = vmatprep.subr.mxu0 0.0
  %474 = vmatpush1.msra.mxu0 0.0
  %475 = vmatprep.subr.mxu0 0.0
  %476 = vmatpush1.msra.mxu0 0.0
  %477 = vmatprep.subr.mxu0 0.0
  %478 = vmatpush1.msra.mxu0 0.0
  %479 = vmatprep.subr.mxu0 0.0
  %480 = vmatpush1.msra.mxu0 0.0
  %481 = vmatprep.subr.mxu0 0.0
  %482 = vmatpush1.msra.mxu0 0.0
  %483 = vmatprep.subr.mxu0 0.0
  %484 = vmatpush1.msra.mxu0 0.0
  %485 = vmatprep.subr.mxu0 0.0
  %486 = vmatpush1.msra.mxu0 0.0
  %487 = vmatprep.subr.mxu0 0.0
  %488 = vmatpush1.msra.mxu0 0.0
  %489 = vmatprep.subr.mxu0 0.0
  %490 = vmatpush1.msra.mxu0 0.0
  %491 = vmatprep.subr.mxu0 0.0
  %492 = vmatpush1.msra.mxu0 0.0
  %493 = vmatprep.subr.mxu0 0.0
  %494 = vmatpush1.msra.mxu0 0.0
  %495 = vmatprep.subr.mxu0 0.0
  %496 = vmatpush1.msra.mxu0 0.0
  %497 = vmatprep.subr.mxu0 0.0
  %498 = vmatpush1.msra.mxu0 0.0
  %499 = vmatprep.subr.mxu0 0.0
  %500 = vmatpush1.msra.mxu0 0.0
  %501 = vmatprep.subr.mxu0 0.0
  %502 = vmatpush1.msra.mxu0 0.0
  %503 = vmatprep.subr.mxu0 0.0
  %504 = vmatpush1.msra.mxu0 0.0
  %505 = vmatprep.subr.mxu0 0.0
  %506 = vmatpush1.msra.mxu0 0.0
  %507 = vmatprep.subr.mxu0 0.0
  %508 = vmatpush1.msra.mxu0 0.0
  %509 = vmatprep.subr.mxu0 0.0
  %510 = vmatpush1.msra.mxu0 0.0
  %511 = vmatprep.subr.mxu0 0.0
  %512 = vmatpush1.msra.mxu0 0.0
  %513 = vmatprep.subr.mxu0 0.0
  %514 = vmatpush1.msra.mxu0 0.0
  %515 = vmatprep.subr.mxu0 0.0
  %516 = vmatpush1.msra.mxu0 0.0
  %517 = vmatprep.mubr.f32.mxu0 0.0
  %518 = vmatmul.mubr.f32.gmra.mrb[0].mxu0 %v380
  %v519 = vpop.f32.mrb[0].mxu0
  %v520 = vadd.f32 %v376, %v519
  %v521 = vpop.f32.mrb[0].mxu0
  %v522 = vadd.f32 %v376, %v521
  %523 = vdwg.mxu0
  %524 = vmatprep.subr.mxu0 %v323
  %525 = vmatpush1.msra.mxu0 %v322
  %526 = vmatprep.subr.mxu0 %v329
  %527 = vmatpush1.msra.mxu0 %v328
  %528 = vmatprep.subr.mxu0 %v335
  %529 = vmatpush1.msra.mxu0 %v334
  %530 = vmatprep.subr.mxu0 %v341
  %531 = vmatpush1.msra.mxu0 %v340
  %532 = vmatprep.subr.mxu0 %v347
  %533 = vmatpush1.msra.mxu0 %v346
  %534 = vmatprep.subr.mxu0 %v353
  %535 = vmatpush1.msra.mxu0 %v352
  %536 = vmatprep.subr.mxu0 %v359
  %537 = vmatpush1.msra.mxu0 %v358
  %538 = vmatprep.subr.mxu0 %v365
  %539 = vmatpush1.msra.mxu0 %v364
  %540 = vmatprep.subr.mxu0 %v371
  %541 = vmatpush1.msra.mxu0 %v370
  %542 = vmatprep.subr.mxu0 0.0
  %543 = vmatpush1.msra.mxu0 0.0
  %544 = vmatprep.subr.mxu0 0.0
  %545 = vmatpush1.msra.mxu0 0.0
  %546 = vmatprep.subr.mxu0 0.0
  %547 = vmatpush1.msra.mxu0 0.0
  %548 = vmatprep.subr.mxu0 0.0
  %549 = vmatpush1.msra.mxu0 0.0
  %550 = vmatprep.subr.mxu0 0.0
  %551 = vmatpush1.msra.mxu0 0.0
  %552 = vmatprep.subr.mxu0 0.0
  %553 = vmatpush1.msra.mxu0 0.0
  %554 = vmatprep.subr.mxu0 0.0
  %555 = vmatpush1.msra.mxu0 0.0
  %556 = vmatprep.subr.mxu0 0.0
  %557 = vmatpush1.msra.mxu0 0.0
  %558 = vmatprep.subr.mxu0 0.0
  %559 = vmatpush1.msra.mxu0 0.0
  %560 = vmatprep.subr.mxu0 0.0
  %561 = vmatpush1.msra.mxu0 0.0
  %562 = vmatprep.subr.mxu0 0.0
  %563 = vmatpush1.msra.mxu0 0.0
  %564 = vmatprep.subr.mxu0 0.0
  %565 = vmatpush1.msra.mxu0 0.0
  %566 = vmatprep.subr.mxu0 0.0
  %567 = vmatpush1.msra.mxu0 0.0
  %568 = vmatprep.subr.mxu0 0.0
  %569 = vmatpush1.msra.mxu0 0.0
  %570 = vmatprep.subr.mxu0 0.0
  %571 = vmatpush1.msra.mxu0 0.0
  %572 = vmatprep.subr.mxu0 0.0
  %573 = vmatpush1.msra.mxu0 0.0
  %574 = vmatprep.subr.mxu0 0.0
  %575 = vmatpush1.msra.mxu0 0.0
  %576 = vmatprep.subr.mxu0 0.0
  %577 = vmatpush1.msra.mxu0 0.0
  %578 = vmatprep.subr.mxu0 0.0
  %579 = vmatpush1.msra.mxu0 0.0
  %580 = vmatprep.subr.mxu0 0.0
  %581 = vmatpush1.msra.mxu0 0.0
  %582 = vmatprep.subr.mxu0 0.0
  %583 = vmatpush1.msra.mxu0 0.0
  %584 = vmatprep.subr.mxu0 0.0
  %585 = vmatpush1.msra.mxu0 0.0
  %586 = vmatprep.subr.mxu0 0.0
  %587 = vmatpush1.msra.mxu0 0.0
  %588 = vmatprep.mubr.f32.mxu0 0.0
  %589 = vmatmul.mubr.f32.gmra.mrb[0].mxu0 %v380
  %v590 = vpop.f32.mrb[0].mxu0
  %v591 = vadd.f32 %v376, %v590
  %v592 = vpop.f32.mrb[0].mxu0
  %v593 = vadd.f32 %v376, %v592
  %594 = vdwg.mxu0
  %v595 = vmax.f32 %v449, 0.0
  %v596 = vmax.f32 %v451, 0.0
  %v597 = vmax.f32 %v520, 0.0
  %v598 = vmax.f32 %v522, 0.0
  %v599 = vmax.f32 %v591, 0.0
  %v600 = vmax.f32 %v593, 0.0
  %601 = vst [vmem:[%s3] sm:$0xff] %v595
  %602 = vst [vmem:[%s3 + $0x8] sm:$0xff] %v596
  %603 = vst [vmem:[%s3 + $0x10] sm:$0xff] %v597
  %s604 = scalar_lea.vmem %s3, 24
  %605 = vst [vmem:[%s604] sm:$0xff] %v598
  %606 = vst [vmem:[%s604 + $0x8] sm:$0xff] %v599
  %607 = vst [vmem:[%s604 + $0x10] sm:$0xff] %v600
  // Predicated region
  $region14: #{conv_bn_act.1} parent=0 // pred_check
    _
  $region15: #{conv_bn_act.1} parent=0 // pred_check_branch
    %609 = sbr.rel (0) target = $region17
  $region16: #{conv_bn_act.1} parent=0 // pred_region
    _
  $region17: #{conv_bn_act.1} parent=0 // pred_fallthru
    _
  // Predicated region
  $region18: #{conv_bn_act.1} parent=0 // pred_check
    _
  $region19: #{conv_bn_act.1} parent=0 // pred_check_branch
    %611 = sbr.rel (0) target = $region21
  $region20: #{conv_bn_act.1} parent=0 // pred_region
    _
  $region21: #{conv_bn_act.1} parent=0 // pred_fallthru
    _

</llo_original>
